<compile_context>
chip_gen: v7x
topology: tpu7x:2x2x1
jax: 0.10.0
libtpu: 0.0.40
codegen_flags: <defaults>
</compile_context>

<pallas_src>
import jax
import jax.numpy as jnp
from jax.experimental import pallas as pl
from jax.experimental.pallas import tpu as pltpu


def attention_kernel(enc_ref, dec_ref, wenc_ref, wdec_ref, bias_ref, wf_ref,
                     awe_ref, alpha_ref):
    # enc_ref   : (1, P, E)   bf16 encoder features for this batch element
    # dec_ref   : (1, 1, D)   bf16 decoder hidden state for this batch element
    # wenc_ref  : (E, Apad)   bf16 encoder_att weight (in, out), zero-padded A
    # wdec_ref  : (D, Apad)   bf16 decoder_att weight (in, out), zero-padded A
    # bias_ref  : (1, Apad)   f32  combined encoder_att + decoder_att bias
    # wf_ref    : (1, Apad)   f32  full_att weight row (full_att bias dropped:
    #                              softmax is shift-invariant, so it cancels)
    # awe_ref   : (1, 1, E)   f32  attention-weighted encoding
    # alpha_ref : (1, 1, P)   f32  attention weights (lane-dense row)
    f32 = jnp.float32

    enc = enc_ref[0]                                                  # (P, E)  bf16
    dec = dec_ref[0]                                                  # (1, D)  bf16

    # Projections on the MXU: bf16 operands, f32 accumulation.
    att1 = jnp.dot(enc, wenc_ref[...], preferred_element_type=f32)   # (P, Apad)
    att2 = jnp.dot(dec, wdec_ref[...], preferred_element_type=f32)   # (1, Apad)

    # VPU sublane-broadcast add of the (1, Apad) row + ReLU, all in f32.
    h = jnp.maximum(att1 + (att2 + bias_ref[...]), 0.0)              # (P, Apad)

    # full_att score per pixel, produced directly as a lane-dense row.
    s = jnp.dot(wf_ref[...], h.T, preferred_element_type=f32)        # (1, P)

    # Softmax over the pixel (lane) axis.
    m = jnp.max(s, axis=-1, keepdims=True)                           # (1, 1)
    e = jnp.exp(s - m)                                               # (1, P)
    d = jnp.sum(e, axis=-1, keepdims=True)                           # (1, 1)
    r = pl.reciprocal(d, approx=True)                                # EUP
    r = r * (2.0 - d * r)                                            # Newton step 1
    r = r * (2.0 - d * r)                                            # Newton step 2
    alpha = e * r                                                    # (1, P) f32

    # Attention-weighted encoding: one (1, P) @ (P, E) MXU matmul.
    awe = jnp.dot(alpha.astype(enc.dtype), enc, preferred_element_type=f32)

    awe_ref[0] = awe
    alpha_ref[0] = alpha


def attention_forward(encoder_out, decoder_hidden, params):
    B, P, E = encoder_out.shape
    D = decoder_hidden.shape[1]
    A = params["wenc"].shape[1]

    # Pad attention dim to MXU-friendly width (128; 256 once A > 128).
    lane = 128 if A <= 128 else 256
    Apad = ((A + lane - 1) // lane) * lane

    def pad_a(x):
        return jnp.pad(x, ((0, 0), (0, Apad - A)))

    # ---- wrapper-side layout / dtype plumbing ----
    enc_bf = encoder_out.astype(jnp.bfloat16)                        # (B, P, E)
    dec_bf = decoder_hidden.reshape(B, 1, D).astype(jnp.bfloat16)    # (B, 1, D)

    wenc_p = pad_a(params["wenc"]).astype(jnp.bfloat16)              # (E, Apad)
    wdec_p = pad_a(params["wdec"]).astype(jnp.bfloat16)              # (D, Apad)
    bias_p = pad_a(params["benc"] + params["bdec"]).astype(jnp.float32)   # (1, Apad)
    wf_p = pad_a(params["wf"]).astype(jnp.float32)                   # (1, Apad)
    # full_att bias dropped: softmax(x + c) == softmax(x) exactly.

    out_shapes = (
        jax.ShapeDtypeStruct((B, 1, E), jnp.float32),   # attention-weighted encoding
        jax.ShapeDtypeStruct((B, 1, P), jnp.float32),   # alpha
    )

    flops = B * (2 * P * E * Apad + 2 * D * Apad + 2 * Apad * P + 2 * P * E)
    bytes_accessed = (2 * B * P * E + 2 * B * D            # bf16 enc / dec
                      + 2 * (E + D) * Apad + 8 * Apad      # weights / biases
                      + 4 * B * E + 4 * B * P)             # outputs

    awe, alpha = pl.pallas_call(
        attention_kernel,
        out_shape=out_shapes,
        grid=(B,),
        in_specs=[
            pl.BlockSpec((1, P, E), lambda b: (b, 0, 0)),   # enc: streamed per step
            pl.BlockSpec((1, 1, D), lambda b: (b, 0, 0)),   # dec: streamed per step
            pl.BlockSpec((E, Apad), lambda b: (0, 0)),      # wenc: resident
            pl.BlockSpec((D, Apad), lambda b: (0, 0)),      # wdec: resident
            pl.BlockSpec((1, Apad), lambda b: (0, 0)),      # combined bias: resident
            pl.BlockSpec((1, Apad), lambda b: (0, 0)),      # full_att weight: resident
        ],
        out_specs=(
            pl.BlockSpec((1, 1, E), lambda b: (b, 0, 0)),
            pl.BlockSpec((1, 1, P), lambda b: (b, 0, 0)),
        ),
        compiler_params=pltpu.CompilerParams(
            dimension_semantics=("parallel",),
            vmem_limit_bytes=32 * 1024 * 1024,
        ),
        cost_estimate=pl.CostEstimate(flops=flops,
                                      transcendentals=B * (P + 1),
                                      bytes_accessed=bytes_accessed),
    )(enc_bf, dec_bf, wenc_p, wdec_p, bias_p, wf_p)

    return awe.reshape(B, E), alpha.reshape(B, P)


def reference_forward(encoder_out, decoder_hidden, params):
    """Pure-JAX f32 reference mirroring the PyTorch forward."""
    att1 = encoder_out @ params["wenc"] + params["benc"]                 # (B, P, A)
    att2 = decoder_hidden @ params["wdec"] + params["bdec"]              # (B, A)
    h = jnp.maximum(att1 + att2[:, None, :], 0.0)                        # (B, P, A)
    att = jnp.sum(h * params["wf"][0], axis=-1) + params["bf"][0, 0]     # (B, P)
    alpha = jax.nn.softmax(att, axis=1)                                  # (B, P)
    awe = jnp.sum(encoder_out * alpha[:, :, None], axis=1)               # (B, E)
    return awe, alpha


def make_params(key, encoder_dim, decoder_dim, attention_dim):
    k1, k2, k3, k4, k5, k6 = jax.random.split(key, 6)
    scale_e = 1.0 / jnp.sqrt(encoder_dim)
    scale_d = 1.0 / jnp.sqrt(decoder_dim)
    scale_a = 1.0 / jnp.sqrt(attention_dim)
    return {
        # stored as (in_dim, out_dim), i.e. transposed w.r.t. torch's (out, in)
        "wenc": jax.random.uniform(k1, (encoder_dim, attention_dim),
                                   jnp.float32, -scale_e, scale_e),
        "benc": jax.random.uniform(k2, (1, attention_dim),
                                   jnp.float32, -scale_e, scale_e),
        "wdec": jax.random.uniform(k3, (decoder_dim, attention_dim),
                                   jnp.float32, -scale_d, scale_d),
        "bdec": jax.random.uniform(k4, (1, attention_dim),
                                   jnp.float32, -scale_d, scale_d),
        "wf": jax.random.uniform(k5, (1, attention_dim),
                                 jnp.float32, -scale_a, scale_a),
        "bf": jax.random.uniform(k6, (1, 1),
                                 jnp.float32, -scale_a, scale_a),
    }


if __name__ == "__main__":
    B, P = 2, 16                 # batch, num_pixels
    E, D, A = 32, 24, 40         # encoder_dim, decoder_dim, attention_dim

    key = jax.random.PRNGKey(0)
    k_enc, k_dec, k_par = jax.random.split(key, 3)

    encoder_out = jax.random.normal(k_enc, (B, P, E), jnp.float32)
    decoder_hidden = jax.random.normal(k_dec, (B, D), jnp.float32)
    params = make_params(k_par, E, D, A)

    awe, alpha = attention_forward(encoder_out, decoder_hidden, params)
    jax.block_until_ready((awe, alpha))

    awe_ref, alpha_ref = reference_forward(encoder_out, decoder_hidden, params)
    assert awe.shape == (B, E) and alpha.shape == (B, P)
    # bf16 MXU operands with f32 accumulation -> relaxed tolerance vs f32 ref.
    assert jnp.allclose(alpha.sum(axis=-1), 1.0, atol=1e-3)
    assert jnp.allclose(awe, awe_ref, atol=2e-2, rtol=2e-2)
    assert jnp.allclose(alpha, alpha_ref, atol=2e-2, rtol=2e-2)

    print("KERNEL_OK")
</pallas_src>

<mosaic_0001>
module attributes {stable_mosaic.version = 11 : i64} {
  func.func @attention_kernel(%arg0: i32, %arg1: memref<1x16x32xbf16, #tpu.memory_space<vmem>>, %arg2: memref<1x1x24xbf16, #tpu.memory_space<vmem>>, %arg3: memref<32x128xbf16, #tpu.memory_space<vmem>>, %arg4: memref<24x128xbf16, #tpu.memory_space<vmem>>, %arg5: memref<1x128xf32, #tpu.memory_space<vmem>>, %arg6: memref<1x128xf32, #tpu.memory_space<vmem>>, %arg7: memref<1x1x32xf32, #tpu.memory_space<vmem>>, %arg8: memref<1x1x16xf32, #tpu.memory_space<vmem>>) attributes {dimension_semantics = [#tpu.dimension_semantics<parallel>], iteration_bounds = array<i64: 2>, scalar_prefetch = 0 : i64, scratch_operands = 0 : i64, tpu.core_type = #tpu.core_type<tc>, window_params = [{transform_indices = @transform_0, window_bounds = array<i64: 1, 16, 32>}, {transform_indices = @transform_1, window_bounds = array<i64: 1, 1, 24>}, {pipeline_mode = #tpu.pipeline_mode<synchronous>, transform_indices = @transform_2, window_bounds = array<i64: 32, 128>}, {pipeline_mode = #tpu.pipeline_mode<synchronous>, transform_indices = @transform_3, window_bounds = array<i64: 24, 128>}, {pipeline_mode = #tpu.pipeline_mode<synchronous>, transform_indices = @transform_4, window_bounds = array<i64: 1, 128>}, {pipeline_mode = #tpu.pipeline_mode<synchronous>, transform_indices = @transform_5, window_bounds = array<i64: 1, 128>}, {transform_indices = @transform_6, window_bounds = array<i64: 1, 1, 32>}, {transform_indices = @transform_7, window_bounds = array<i64: 1, 1, 16>}]} {
    %c0 = arith.constant 0 : index
    %c0_0 = arith.constant 0 : index
    %c0_1 = arith.constant 0 : index
    %0 = vector.load %arg1[%c0, %c0_0, %c0_1] : memref<1x16x32xbf16, #tpu.memory_space<vmem>>, vector<1x16x32xbf16>
    %1 = vector.shape_cast %0 : vector<1x16x32xbf16> to vector<16x32xbf16>
    %c0_2 = arith.constant 0 : index
    %c0_3 = arith.constant 0 : index
    %c0_4 = arith.constant 0 : index
    %2 = vector.load %arg2[%c0_2, %c0_3, %c0_4] : memref<1x1x24xbf16, #tpu.memory_space<vmem>>, vector<1x1x24xbf16>
    %3 = vector.shape_cast %2 : vector<1x1x24xbf16> to vector<1x24xbf16>
    %c0_5 = arith.constant 0 : index
    %c0_6 = arith.constant 0 : index
    %4 = vector.load %arg3[%c0_5, %c0_6] : memref<32x128xbf16, #tpu.memory_space<vmem>>, vector<32x128xbf16>
    %cst = arith.constant dense<0.000000e+00> : vector<16x128xf32>
    %5 = tpu.matmul %1, %4, %cst {dimension_numbers = #tpu.dot_dimension_numbers<[1], [0], [0], [1], [0, 0, 1, 1], [], []>} : vector<16x32xbf16>, vector<32x128xbf16>, vector<16x128xf32> -> vector<16x128xf32>
    %c0_7 = arith.constant 0 : index
    %c0_8 = arith.constant 0 : index
    %6 = vector.load %arg4[%c0_7, %c0_8] : memref<24x128xbf16, #tpu.memory_space<vmem>>, vector<24x128xbf16>
    %cst_9 = arith.constant dense<0.000000e+00> : vector<1x128xf32>
    %7 = tpu.matmul %3, %6, %cst_9 {dimension_numbers = #tpu.dot_dimension_numbers<[1], [0], [0], [1], [0, 0, 1, 1], [], []>} : vector<1x24xbf16>, vector<24x128xbf16>, vector<1x128xf32> -> vector<1x128xf32>
    %c0_10 = arith.constant 0 : index
    %c0_11 = arith.constant 0 : index
    %8 = vector.load %arg5[%c0_10, %c0_11] : memref<1x128xf32, #tpu.memory_space<vmem>>, vector<1x128xf32>
    %9 = arith.addf %7, %8 : vector<1x128xf32>
    %10 = vector.broadcast %9 : vector<1x128xf32> to vector<16x128xf32>
    %11 = arith.addf %5, %10 : vector<16x128xf32>
    %cst_12 = arith.constant 0.000000e+00 : f32
    %12 = vector.broadcast %cst_12 : f32 to vector<16x128xf32>
    %13 = arith.maximumf %11, %12 : vector<16x128xf32>
    %c0_13 = arith.constant 0 : index
    %c0_14 = arith.constant 0 : index
    %14 = vector.load %arg6[%c0_13, %c0_14] : memref<1x128xf32, #tpu.memory_space<vmem>>, vector<1x128xf32>
    %15 = tpu.transpose %13, [1, 0] : vector<16x128xf32> -> vector<128x16xf32>
    %cst_15 = arith.constant dense<0.000000e+00> : vector<1x16xf32>
    %16 = tpu.matmul %14, %15, %cst_15 {dimension_numbers = #tpu.dot_dimension_numbers<[1], [0], [0], [1], [0, 0, 1, 1], [], []>} : vector<1x128xf32>, vector<128x16xf32>, vector<1x16xf32> -> vector<1x16xf32>
    %cst_16 = arith.constant dense<0xFF800000> : vector<1xf32>
    %17 = vector.multi_reduction <maximumf>, %16, %cst_16 [1] : vector<1x16xf32> to vector<1xf32>
    %18 = vector.shape_cast %17 : vector<1xf32> to vector<1x1xf32>
    %19 = vector.broadcast %18 : vector<1x1xf32> to vector<1x16xf32>
    %20 = arith.subf %16, %19 : vector<1x16xf32>
    %21 = math.exp %20 : vector<1x16xf32>
    %cst_17 = arith.constant dense<0.000000e+00> : vector<1xf32>
    %22 = vector.multi_reduction <add>, %21, %cst_17 [1] : vector<1x16xf32> to vector<1xf32>
    %23 = vector.shape_cast %22 : vector<1xf32> to vector<1x1xf32>
    %24 = tpu.reciprocal %23 {approx = true} : vector<1x1xf32> -> vector<1x1xf32>
    %25 = arith.mulf %23, %24 : vector<1x1xf32>
    %cst_18 = arith.constant 2.000000e+00 : f32
    %26 = vector.broadcast %cst_18 : f32 to vector<1x1xf32>
    %27 = arith.subf %26, %25 : vector<1x1xf32>
    %28 = arith.mulf %24, %27 : vector<1x1xf32>
    %29 = arith.mulf %23, %28 : vector<1x1xf32>
    %cst_19 = arith.constant 2.000000e+00 : f32
    %30 = vector.broadcast %cst_19 : f32 to vector<1x1xf32>
    %31 = arith.subf %30, %29 : vector<1x1xf32>
    %32 = arith.mulf %28, %31 : vector<1x1xf32>
    %33 = vector.broadcast %32 : vector<1x1xf32> to vector<1x16xf32>
    %34 = arith.mulf %21, %33 : vector<1x16xf32>
    %35 = arith.truncf %34 : vector<1x16xf32> to vector<1x16xbf16>
    %cst_20 = arith.constant dense<0.000000e+00> : vector<1x32xf32>
    %36 = tpu.matmul %35, %1, %cst_20 {dimension_numbers = #tpu.dot_dimension_numbers<[1], [0], [0], [1], [0, 0, 1, 1], [], []>} : vector<1x16xbf16>, vector<16x32xbf16>, vector<1x32xf32> -> vector<1x32xf32>
    %c0_21 = arith.constant 0 : index
    %c0_22 = arith.constant 0 : index
    %c0_23 = arith.constant 0 : index
    %37 = vector.load %arg7[%c0_21, %c0_22, %c0_23] : memref<1x1x32xf32, #tpu.memory_space<vmem>>, vector<1x1x32xf32>
    %38 = vector.shape_cast %37 : vector<1x1x32xf32> to vector<1x32xf32>
    %39 = vector.shape_cast %36 : vector<1x32xf32> to vector<1x1x32xf32>
    tpu.vector_store %arg7[%c0_21, %c0_22, %c0_23], %39 {strides = array<i32>} : memref<1x1x32xf32, #tpu.memory_space<vmem>>, vector<1x1x32xf32>,
    %c0_24 = arith.constant 0 : index
    %c0_25 = arith.constant 0 : index
    %c0_26 = arith.constant 0 : index
    %40 = vector.load %arg8[%c0_24, %c0_25, %c0_26] : memref<1x1x16xf32, #tpu.memory_space<vmem>>, vector<1x1x16xf32>
    %41 = vector.shape_cast %40 : vector<1x1x16xf32> to vector<1x16xf32>
    %42 = vector.shape_cast %34 : vector<1x16xf32> to vector<1x1x16xf32>
    tpu.vector_store %arg8[%c0_24, %c0_25, %c0_26], %42 {strides = array<i32>} : memref<1x1x16xf32, #tpu.memory_space<vmem>>, vector<1x1x16xf32>,
    return
  }
  func.func @transform_0(%arg0: i32) -> (i32, i32, i32) {
    %c0_i32 = arith.constant 0 : i32
    %c0_i32_0 = arith.constant 0 : i32
    %c0_i32_1 = arith.constant 0 : i32
    return %arg0, %c0_i32, %c0_i32_0 : i32, i32, i32
  }
  func.func @transform_1(%arg0: i32) -> (i32, i32, i32) {
    %c0_i32 = arith.constant 0 : i32
    %c0_i32_0 = arith.constant 0 : i32
    %c0_i32_1 = arith.constant 0 : i32
    return %arg0, %c0_i32, %c0_i32_0 : i32, i32, i32
  }
  func.func @transform_2(%arg0: i32) -> (i32, i32) {
    %c0_i32 = arith.constant 0 : i32
    %c0_i32_0 = arith.constant 0 : i32
    %c0_i32_1 = arith.constant 0 : i32
    return %c0_i32, %c0_i32_0 : i32, i32
  }
  func.func @transform_3(%arg0: i32) -> (i32, i32) {
    %c0_i32 = arith.constant 0 : i32
    %c0_i32_0 = arith.constant 0 : i32
    %c0_i32_1 = arith.constant 0 : i32
    return %c0_i32, %c0_i32_0 : i32, i32
  }
  func.func @transform_4(%arg0: i32) -> (i32, i32) {
    %c0_i32 = arith.constant 0 : i32
    %c0_i32_0 = arith.constant 0 : i32
    %c0_i32_1 = arith.constant 0 : i32
    return %c0_i32, %c0_i32_0 : i32, i32
  }
  func.func @transform_5(%arg0: i32) -> (i32, i32) {
    %c0_i32 = arith.constant 0 : i32
    %c0_i32_0 = arith.constant 0 : i32
    %c0_i32_1 = arith.constant 0 : i32
    return %c0_i32, %c0_i32_0 : i32, i32
  }
  func.func @transform_6(%arg0: i32) -> (i32, i32, i32) {
    %c0_i32 = arith.constant 0 : i32
    %c0_i32_0 = arith.constant 0 : i32
    %c0_i32_1 = arith.constant 0 : i32
    return %arg0, %c0_i32, %c0_i32_0 : i32, i32, i32
  }
  func.func @transform_7(%arg0: i32) -> (i32, i32, i32) {
    %c0_i32 = arith.constant 0 : i32
    %c0_i32_0 = arith.constant 0 : i32
    %c0_i32_1 = arith.constant 0 : i32
    return %arg0, %c0_i32, %c0_i32_0 : i32, i32, i32
  }
}

</mosaic_0001>

<llo_original>
// kernel: tpu_custom_call.1
$region0: #{tpu_custom_call.1}
  #allocation0 [shape = 'u32[]', space=smem, size = 0x4, offset = 0x4, fixed_abs, tag = 'smem constant byte address 0x4 - core index']
  #allocation1 [shape = 'u32[144,128]{1,0:T(1,128)}', space=vmem, size = 0x12000, scoped, tag = 'internal scratch']
  %s0 = inlined_call_operand.hbm [shape: bf16[2,16,32], index: 0, kind: input, shape index: {}]
  %s1 = inlined_call_operand.vmem [shape: bf16[2,1,24], index: 1, kind: input, shape index: {}]
  %s2 = inlined_call_operand.hbm [shape: bf16[32,128], index: 2, kind: input, shape index: {}]
  %s3 = inlined_call_operand.vmem [shape: bf16[24,128], index: 3, kind: input, shape index: {}]
  %s4 = inlined_call_operand.vmem [shape: f32[1,128], index: 4, kind: input, shape index: {}]
  %s5 = inlined_call_operand.vmem [shape: f32[1,128], index: 5, kind: input, shape index: {}]
  %s6 = inlined_call_operand.hbm [shape: f32[2,1,32], index: 6, kind: output, shape index: {0}]
  %s7 = inlined_call_operand.hbm [shape: f32[2,1,16], index: 7, kind: output, shape index: {1}]
  %8 = xla_tuple %s6, %s7
  %s9 = sld [smem:[#allocation0]]
  $region73: #{tpu_custom_call.1} parent=0
    _
  %s11 = ssub.s32 1, %s9
  %s12 = scalar_select 0, %s11, %s9
  $region1: #{tpu_custom_call.1} parent=0
    #allocation2 [shape = 'u8[8192]{0}', space=vmem, size = 0x2000, scoped, tag = 'input window, operand 0']
    #allocation3 [shape = 's32[2]{0}', space=sflag, size = 0x8, scoped, tag = 'scoped memory for tpu_custom_call.1']
    #allocation4 [shape = 's32[2]{0}', space=sflag, size = 0x8, scoped, tag = 'scoped memory for tpu_custom_call.1']
    #allocation5 [shape = 'u8[8192]{0}', space=vmem, size = 0x2000, scoped, tag = 'input window, operand 2, single buffered']
    #allocation6 [shape = 's32[1]{0}', space=sflag, size = 0x4, scoped, tag = 'scoped memory for tpu_custom_call.1']
    #allocation7 [shape = 'u8[1024]{0}', space=vmem, size = 0x400, scoped, tag = 'output window, operand 0']
    #allocation8 [shape = 'u8[1024]{0}', space=vmem, size = 0x400, scoped, tag = 'output window, operand 1']
    #allocation9 [shape = 's32[2]{0}', space=sflag, size = 0x8, scoped, tag = 'scoped memory for tpu_custom_call.1']
    %13 = vsyncpa [#allocation3], 0
    %s14 = scalar_lea.sflag [#allocation3], 1
    %15 = vsyncpa %s14, 0
    %16 = vsyncpa [#allocation6], 0
    %17 = vsyncpa [#allocation4], 0
    %s18 = scalar_lea.sflag [#allocation4], 1
    %19 = vsyncpa %s18, 0
    %20 = vsyncpa [#allocation9], 0
    %s21 = scalar_lea.sflag [#allocation9], 1
    %22 = vsyncpa %s21, 0
    loop: start=0, step=1, limit=4
    $region2: #{tpu_custom_call.1} parent=1 // loop_pre_header
      _
    $region3: #{tpu_custom_call.1} parent=1 // loop_header
      %s24 = sphi 0, %s28
      %p25 = scmp.ge.s32.totalorder %s24, 4
      %s34 = sphi 0, %s36
      %s37 = sphi 0, %s34
      %s38 = sphi 0, %s37
      %s54 = sphi 0, %s38
      %s60 = sphi 0, %s62
      %s63 = sphi 0, %s60
      %s64 = sphi 0, %s63
      %s80 = sphi 0, %s64
      %s84 = sphi 0, %s84
      %s86 = sphi 0, %s84
      %s87 = sphi 0, %s86
      %s101 = sphi 0, %s87
      %s105 = sphi 0, %s105
      %s107 = sphi 0, %s105
      %s108 = sphi 0, %s107
      %s122 = sphi 0, %s108
      %s126 = sphi 0, %s126
      %s128 = sphi 0, %s126
      %s129 = sphi 0, %s128
      %s143 = sphi 0, %s129
      %s147 = sphi 0, %s147
      %s149 = sphi 0, %s147
      %s150 = sphi 0, %s149
      %s164 = sphi 0, %s150
      %s170 = sphi 0, %s172
      %s173 = sphi 0, %s170
      %s174 = sphi 0, %s173
      %s190 = sphi 0, %s174
      %s196 = sphi 0, %s198
      %s199 = sphi 0, %s196
      %s200 = sphi 0, %s199
      %s216 = sphi 0, %s200
    $region4: #{tpu_custom_call.1} parent=1 // loop_header_branch
      %27 = sbr.rel (%p25) target = $region8
    $region5: #{tpu_custom_call.1} parent=1 // loop_body
      %s29 = ssub.s32 %s24, 1
      %s30 = ssub.s32 %s24, 2
      %s31 = sadd.s32 %s24, 1
      %s32 = ssub.s32 %s24, %s31
      %p33 = scmp.eq.s32.totalorder %s32, 0
      %s35 = sadd.s32 %s34, 1
      %s36 = scalar_select %p33, %s34, %s35
      %p39 = pneg %p33
      %p40 = scmp.eq.s32.totalorder %s24, 1
      %p41 = por %p39, %p40
      %p42 = scmp.ne.s32.totalorder %s34, %s37
      %p43 = scmp.eq.s32.totalorder %s24, 0
      %p44 = por %p42, %p43
      %p45 = scmp.ne.s32.totalorder %s34, %s37
      %p46 = scmp.eq.s32.totalorder %s29, 1
      %p47 = por %p45, %p46
      %p48 = scmp.ne.s32.totalorder %s37, %s38
      %p49 = scmp.eq.s32.totalorder %s29, 0
      %p50 = por %p48, %p49
      %p51 = scmp.ne.s32.totalorder %s37, %s38
      %p52 = scmp.eq.s32.totalorder %s30, 1
      %p53 = por %p51, %p52
      %p55 = scmp.ne.s32.totalorder %s38, %s54
      %p56 = scmp.eq.s32.totalorder %s30, 0
      %p57 = por %p55, %p56
      %s58 = ssub.s32 %s24, %s31
      %p59 = scmp.eq.s32.totalorder %s58, 0
      %s61 = sadd.s32 %s60, 1
      %s62 = scalar_select %p59, %s60, %s61
      %p65 = pneg %p59
      %p66 = scmp.eq.s32.totalorder %s24, 1
      %p67 = por %p65, %p66
      %p68 = scmp.ne.s32.totalorder %s60, %s63
      %p69 = scmp.eq.s32.totalorder %s24, 0
      %p70 = por %p68, %p69
      %p71 = scmp.ne.s32.totalorder %s60, %s63
      %p72 = scmp.eq.s32.totalorder %s29, 1
      %p73 = por %p71, %p72
      %p74 = scmp.ne.s32.totalorder %s63, %s64
      %p75 = scmp.eq.s32.totalorder %s29, 0
      %p76 = por %p74, %p75
      %p77 = scmp.ne.s32.totalorder %s63, %s64
      %p78 = scmp.eq.s32.totalorder %s30, 1
      %p79 = por %p77, %p78
      %p81 = scmp.ne.s32.totalorder %s64, %s80
      %p82 = scmp.eq.s32.totalorder %s30, 0
      %p83 = por %p81, %p82
      %s85 = sadd.s32 %s84, 1
      %p88 = scmp.eq.s32.totalorder %s24, 1
      %p89 = scmp.ne.s32.totalorder %s84, %s86
      %p90 = scmp.eq.s32.totalorder %s24, 0
      %p91 = por %p89, %p90
      %p92 = scmp.ne.s32.totalorder %s84, %s86
      %p93 = scmp.eq.s32.totalorder %s29, 1
      %p94 = por %p92, %p93
      %p95 = scmp.ne.s32.totalorder %s86, %s87
      %p96 = scmp.eq.s32.totalorder %s29, 0
      %p97 = por %p95, %p96
      %p98 = scmp.ne.s32.totalorder %s86, %s87
      %p99 = scmp.eq.s32.totalorder %s30, 1
      %p100 = por %p98, %p99
      %p102 = scmp.ne.s32.totalorder %s87, %s101
      %p103 = scmp.eq.s32.totalorder %s30, 0
      %p104 = por %p102, %p103
      %s106 = sadd.s32 %s105, 1
      %p109 = scmp.eq.s32.totalorder %s24, 1
      %p110 = scmp.ne.s32.totalorder %s105, %s107
      %p111 = scmp.eq.s32.totalorder %s24, 0
      %p112 = por %p110, %p111
      %p113 = scmp.ne.s32.totalorder %s105, %s107
      %p114 = scmp.eq.s32.totalorder %s29, 1
      %p115 = por %p113, %p114
      %p116 = scmp.ne.s32.totalorder %s107, %s108
      %p117 = scmp.eq.s32.totalorder %s29, 0
      %p118 = por %p116, %p117
      %p119 = scmp.ne.s32.totalorder %s107, %s108
      %p120 = scmp.eq.s32.totalorder %s30, 1
      %p121 = por %p119, %p120
      %p123 = scmp.ne.s32.totalorder %s108, %s122
      %p124 = scmp.eq.s32.totalorder %s30, 0
      %p125 = por %p123, %p124
      %s127 = sadd.s32 %s126, 1
      %p130 = scmp.eq.s32.totalorder %s24, 1
      %p131 = scmp.ne.s32.totalorder %s126, %s128
      %p132 = scmp.eq.s32.totalorder %s24, 0
      %p133 = por %p131, %p132
      %p134 = scmp.ne.s32.totalorder %s126, %s128
      %p135 = scmp.eq.s32.totalorder %s29, 1
      %p136 = por %p134, %p135
      %p137 = scmp.ne.s32.totalorder %s128, %s129
      %p138 = scmp.eq.s32.totalorder %s29, 0
      %p139 = por %p137, %p138
      %p140 = scmp.ne.s32.totalorder %s128, %s129
      %p141 = scmp.eq.s32.totalorder %s30, 1
      %p142 = por %p140, %p141
      %p144 = scmp.ne.s32.totalorder %s129, %s143
      %p145 = scmp.eq.s32.totalorder %s30, 0
      %p146 = por %p144, %p145
      %s148 = sadd.s32 %s147, 1
      %p151 = scmp.eq.s32.totalorder %s24, 1
      %p152 = scmp.ne.s32.totalorder %s147, %s149
      %p153 = scmp.eq.s32.totalorder %s24, 0
      %p154 = por %p152, %p153
      %p155 = scmp.ne.s32.totalorder %s147, %s149
      %p156 = scmp.eq.s32.totalorder %s29, 1
      %p157 = por %p155, %p156
      %p158 = scmp.ne.s32.totalorder %s149, %s150
      %p159 = scmp.eq.s32.totalorder %s29, 0
      %p160 = por %p158, %p159
      %p161 = scmp.ne.s32.totalorder %s149, %s150
      %p162 = scmp.eq.s32.totalorder %s30, 1
      %p163 = por %p161, %p162
      %p165 = scmp.ne.s32.totalorder %s150, %s164
      %p166 = scmp.eq.s32.totalorder %s30, 0
      %p167 = por %p165, %p166
      %s168 = ssub.s32 %s24, %s31
      %p169 = scmp.eq.s32.totalorder %s168, 0
      %s171 = sadd.s32 %s170, 1
      %s172 = scalar_select %p169, %s170, %s171
      %p175 = pneg %p169
      %p176 = scmp.eq.s32.totalorder %s24, 1
      %p177 = por %p175, %p176
      %p178 = scmp.ne.s32.totalorder %s170, %s173
      %p179 = scmp.eq.s32.totalorder %s24, 0
      %p180 = por %p178, %p179
      %p181 = scmp.ne.s32.totalorder %s170, %s173
      %p182 = scmp.eq.s32.totalorder %s29, 1
      %p183 = por %p181, %p182
      %p184 = scmp.ne.s32.totalorder %s173, %s174
      %p185 = scmp.eq.s32.totalorder %s29, 0
      %p186 = por %p184, %p185
      %p187 = scmp.ne.s32.totalorder %s173, %s174
      %p188 = scmp.eq.s32.totalorder %s30, 1
      %p189 = por %p187, %p188
      %p191 = scmp.ne.s32.totalorder %s174, %s190
      %p192 = scmp.eq.s32.totalorder %s30, 0
      %p193 = por %p191, %p192
      %s194 = ssub.s32 %s24, %s31
      %p195 = scmp.eq.s32.totalorder %s194, 0
      %s197 = sadd.s32 %s196, 1
      %s198 = scalar_select %p195, %s196, %s197
      %p201 = pneg %p195
      %p202 = scmp.eq.s32.totalorder %s24, 1
      %p203 = por %p201, %p202
      %p204 = scmp.ne.s32.totalorder %s196, %s199
      %p205 = scmp.eq.s32.totalorder %s24, 0
      %p206 = por %p204, %p205
      %p207 = scmp.ne.s32.totalorder %s196, %s199
      %p208 = scmp.eq.s32.totalorder %s29, 1
      %p209 = por %p207, %p208
      %p210 = scmp.ne.s32.totalorder %s199, %s200
      %p211 = scmp.eq.s32.totalorder %s29, 0
      %p212 = por %p210, %p211
      %p213 = scmp.ne.s32.totalorder %s199, %s200
      %p214 = scmp.eq.s32.totalorder %s30, 1
      %p215 = por %p213, %p214
      %p217 = scmp.ne.s32.totalorder %s200, %s216
      %p218 = scmp.eq.s32.totalorder %s30, 0
      %p219 = por %p217, %p218
      %p220 = scmp.le.s32.totalorder 1, %s24
      %p221 = scmp.lt.s32.totalorder %s24, 3
      %p222 = pnand %p220, %p221
      %p223 = pneg %p222
      // Predicated region
      $region9: #{tpu_custom_call.1} parent=5 // pred_check
        _
      $region10: #{tpu_custom_call.1} parent=5 // pred_check_branch
        %225 = sbr.rel (%p222) target = $region12
      $region11: #{tpu_custom_call.1} parent=5 // pred_region
        %s226 = ssub.s32 %s24, 1
        // Predicated region
        $region13: #{tpu_custom_call.1} parent=11 // pred_check
          %p227 = pneg %p97
        $region14: #{tpu_custom_call.1} parent=11 // pred_check_branch
          %229 = sbr.rel (%p227) target = $region16
        $region15: #{tpu_custom_call.1} parent=11 // pred_region
          %s231 = ssub.s32 256, 256
          %232 = vsyncadd [#allocation6], %s231
          %s233 = sshll.u32 [#allocation5], 4
          %s234 = int_to_ptr.vmem [resolvable:$true] %s233
          %239 = dma.hbm_to_vmem [thread:$0]  %s2, 256, %s234, [#allocation6], 64, 64, 4
        $region16: #{tpu_custom_call.1} parent=11 // pred_fallthru
          _
        // Predicated region
        $region17: #{tpu_custom_call.1} parent=11 // pred_check
          %p240 = pneg %p118
        $region18: #{tpu_custom_call.1} parent=11 // pred_check_branch
          %242 = sbr.rel (%p240) target = $region20
        $region19: #{tpu_custom_call.1} parent=11 // pred_region
          _
        $region20: #{tpu_custom_call.1} parent=11 // pred_fallthru
          _
        // Predicated region
        $region21: #{tpu_custom_call.1} parent=11 // pred_check
          %p243 = pneg %p139
        $region22: #{tpu_custom_call.1} parent=11 // pred_check_branch
          %245 = sbr.rel (%p243) target = $region24
        $region23: #{tpu_custom_call.1} parent=11 // pred_region
          _
        $region24: #{tpu_custom_call.1} parent=11 // pred_fallthru
          _
        // Predicated region
        $region25: #{tpu_custom_call.1} parent=11 // pred_check
          %p246 = pneg %p160
        $region26: #{tpu_custom_call.1} parent=11 // pred_check_branch
          %248 = sbr.rel (%p246) target = $region28
        $region27: #{tpu_custom_call.1} parent=11 // pred_region
          _
        $region28: #{tpu_custom_call.1} parent=11 // pred_fallthru
          _
      $region12: #{tpu_custom_call.1} parent=5 // pred_fallthru
        _
      %p249 = scmp.lt.s32.totalorder %s24, 2
      // Predicated region
      $region29: #{tpu_custom_call.1} parent=5 // pred_check
        %p250 = pneg %p249
      $region30: #{tpu_custom_call.1} parent=5 // pred_check_branch
        %252 = sbr.rel (%p250) target = $region32
      $region31: #{tpu_custom_call.1} parent=5 // pred_region
        // Predicated region
        $region33: #{tpu_custom_call.1} parent=31 // pred_check
          %p253 = pneg %p44
        $region34: #{tpu_custom_call.1} parent=31 // pred_check_branch
          %255 = sbr.rel (%p253) target = $region36
        $region35: #{tpu_custom_call.1} parent=31 // pred_region
          %s256 = sand.u32 %s34, 1
          %s257 = scalar_lea.sflag [#allocation3], %s256
          %s258 = sand.u32 %s34, 1
          %s259 = smul.addr %s258, 8
          %s260 = scalar_lea.vmem [#allocation2], %s259
          %s262 = ssub.s32 128, 128
          %263 = vsyncadd %s257, %s262
          %s264 = smul.addr %s24, 2
          %s265 = smul.addr %s264, 64
          %s266 = scalar_lea.hbm %s0, %s265
          %s267 = sshll.u32 %s260, 4
          %s268 = int_to_ptr.vmem [resolvable:$true] %s267
          %273 = dma.hbm_to_vmem [thread:$0]  %s266, 128, %s268, %s257, 64, 64, 4
        $region36: #{tpu_custom_call.1} parent=31 // pred_fallthru
          _
        // Predicated region
        $region37: #{tpu_custom_call.1} parent=31 // pred_check
          %p274 = pneg %p70
        $region38: #{tpu_custom_call.1} parent=31 // pred_check_branch
          %276 = sbr.rel (%p274) target = $region40
        $region39: #{tpu_custom_call.1} parent=31 // pred_region
          %p277 = scmp.lt.s32.totalorder %s24, 1
          %s278 = scalar_select %p277, %s24, 1
          %s279 = scalar_lea.vmem %s1, %s278
        $region40: #{tpu_custom_call.1} parent=31 // pred_fallthru
          _
      $region32: #{tpu_custom_call.1} parent=5 // pred_fallthru
        _
      %p280 = scmp.le.s32.totalorder 1, %s24
      %p281 = scmp.lt.s32.totalorder %s24, 3
      %p282 = pnand %p280, %p281
      %p283 = pneg %p282
      // Predicated region
      $region41: #{tpu_custom_call.1} parent=5 // pred_check
        _
      $region42: #{tpu_custom_call.1} parent=5 // pred_check_branch
        %285 = sbr.rel (%p282) target = $region44
      $region43: #{tpu_custom_call.1} parent=5 // pred_region
        %s286 = ssub.s32 %s24, 1
        %s287 = sand.u32 %s37, 1
        %s288 = scalar_lea.sflag [#allocation3], %s287
        %s289 = sand.u32 %s37, 1
        %s290 = smul.addr %s289, 8
        %s291 = scalar_lea.vmem [#allocation2], %s290
        // Predicated region
        $region45: #{tpu_custom_call.1} parent=43 // pred_check
          %p292 = pneg %p50
        $region46: #{tpu_custom_call.1} parent=43 // pred_check_branch
          %294 = sbr.rel (%p292) target = $region48
        $region47: #{tpu_custom_call.1} parent=43 // pred_region
          %295 = dma.done %s288, 128
        $region48: #{tpu_custom_call.1} parent=43 // pred_fallthru
          _
        // Predicated region
        $region49: #{tpu_custom_call.1} parent=43 // pred_check
          %p296 = pneg %p97
        $region50: #{tpu_custom_call.1} parent=43 // pred_check_branch
          %298 = sbr.rel (%p296) target = $region52
        $region51: #{tpu_custom_call.1} parent=43 // pred_region
          %299 = dma.done [#allocation6], 256
        $region52: #{tpu_custom_call.1} parent=43 // pred_fallthru
          _
        %s300 = sand.u32 %s37, 1
        %s301 = scalar_lea.sflag [#allocation3], %s300
        %s302 = sand.u32 %s37, 1
        %s303 = smul.addr %s302, 8
        %s304 = scalar_lea.vmem [#allocation2], %s303
        %p305 = pneg %p50
        %p306 = pneg %p47
        %p307 = scmp.lt.s32.totalorder %s29, 1
        %s308 = scalar_select %p307, %s29, 1
        %s309 = scalar_lea.vmem %s1, %s308
        %p310 = pneg %p76
        %p311 = pneg %p73
        %p312 = pneg %p97
        %p313 = pneg %p94
        %p314 = pneg %p118
        %p315 = pneg %p115
        %p316 = pneg %p139
        %p317 = pneg %p136
        %p318 = pneg %p160
        %p319 = pneg %p157
        %p320 = pneg %p186
        %p321 = pneg %p183
        %s322 = sand.u32 %s173, 1
        %s323 = scalar_lea.sflag [#allocation4], %s322
        %s324 = sand.u32 %s173, 1
        %s325 = scalar_lea.vmem [#allocation7], %s324
        %p326 = pneg %p212
        %p327 = pneg %p209
        %s328 = sand.u32 %s199, 1
        %s329 = scalar_lea.sflag [#allocation9], %s328
        %s330 = sand.u32 %s199, 1
        %s331 = scalar_lea.vmem [#allocation8], %s330
        %p332 = scmp.lt.s32.totalorder %s29, 1
        %s333 = scalar_select %p332, %s29, 1
        %s334 = scalar_lea.vmem %s1, %s333
        %v336 = vld [vmem:[%s291] sm:$0xf]
        %v337 = vld [vmem:[%s291 + $0x4] sm:$0xf]
        %v338 = vld [vmem:[%s334] sm:$0x1]
        %v339 = vld [vmem:[#allocation5] sm:$0xf]
        %v340 = vld [vmem:[#allocation5 + $0x4] sm:$0xf]
        %v341 = vld [vmem:[#allocation5 + $0x8] sm:$0xf]
        %v342 = vld [vmem:[#allocation5 + $0xc] sm:$0xf]
        %v343 = vld [vmem:[%s3] sm:$0xf]
        %v344 = vld [vmem:[%s3 + $0x4] sm:$0xf]
        %v345 = vld [vmem:[%s3 + $0x8] sm:$0xf]
        %v346 = vld [vmem:[%s4] sm:$0x1]
        %v350 = vunpack.c.l.b16 %v343
        %v351 = vunpack.c.l.b16 %v344
        %v352 = vunpack.c.l.b16 %v345
        %v353 = vpack.c.b16 %v351, %v350
        %v354 = vpack.c.b16 %v352, %v352
        %vm356 = vcmask 195584
        %v358 = vsel %vm356, %v338, 0
        %vm360 = vcmask 1043456
        %v362 = vsel %vm360, %v354, 0
        %364 = vmatprep.subr.bf16.mxu0 0
        %365 = vmatpush1.bf16.msra.mxu0 %v353
        %366 = vmatprep.subr.bf16.mxu0 0
        %367 = vmatpush1.bf16.msra.mxu0 %v362
        %368 = vmatprep.subr.bf16.mxu0 0
        %369 = vmatpush1.bf16.msra.mxu0 0
        %370 = vmatprep.subr.bf16.mxu0 0
        %371 = vmatpush1.bf16.msra.mxu0 0
        %372 = vmatprep.subr.bf16.mxu0 0
        %373 = vmatpush1.bf16.msra.mxu0 0
        %374 = vmatprep.subr.bf16.mxu0 0
        %375 = vmatpush1.bf16.msra.mxu0 0
        %376 = vmatprep.subr.bf16.mxu0 0
        %377 = vmatpush1.bf16.msra.mxu0 0
        %378 = vmatprep.subr.bf16.mxu0 0
        %379 = vmatpush1.bf16.msra.mxu0 0
        %380 = vmatprep.subr.bf16.mxu0 0
        %381 = vmatpush1.bf16.msra.mxu0 0
        %382 = vmatprep.subr.bf16.mxu0 0
        %383 = vmatpush1.bf16.msra.mxu0 0
        %384 = vmatprep.subr.bf16.mxu0 0
        %385 = vmatpush1.bf16.msra.mxu0 0
        %386 = vmatprep.subr.bf16.mxu0 0
        %387 = vmatpush1.bf16.msra.mxu0 0
        %388 = vmatprep.subr.bf16.mxu0 0
        %389 = vmatpush1.bf16.msra.mxu0 0
        %390 = vmatprep.subr.bf16.mxu0 0
        %391 = vmatpush1.bf16.msra.mxu0 0
        %392 = vmatprep.subr.bf16.mxu0 0
        %393 = vmatpush1.bf16.msra.mxu0 0
        %394 = vmatprep.subr.bf16.mxu0 0
        %395 = vmatpush1.bf16.msra.mxu0 0
        %396 = vmatprep.mubr.bf16.mxu0 0
        %397 = vmatmul.mubr.bf16.gmra.mrb[0].mxu0 %v358
        %v398 = vpop.f32.mrb[0].mxu0
        %v399 = vadd.f32 %v346, %v398
        %v400 = vpop.f32.mrb[0].mxu0
        %v401 = vpop.f32.mrb[0].mxu0
        %v402 = vpop.f32.mrb[0].mxu0
        %403 = vdwg.mxu0
        %v404 = vlaneseq
        %v405 = vshrl.u32 %v404, 7
        %v406 = vsub.s32 0, %v405
        %v407 = vrot.slane %v399, %v406
        %v410 = vunpack.c.l.b16 %v336
        %v411 = vunpack.c.l.b16 %v337
        %v412 = vpack.c.b16 %v411, %v410
        %v417 = vunpack.c.l.b16 %v339
        %v418 = vunpack.c.l.b16 %v340
        %v419 = vunpack.c.l.b16 %v341
        %v420 = vunpack.c.l.b16 %v342
        %v421 = vpack.c.b16 %v418, %v417
        %v422 = vpack.c.b16 %v420, %v419
        %vm425 = vcmask 261120
        %v427 = vsel %vm425, %v412, 0
        %429 = vmatprep.subr.bf16.mxu0 0
        %430 = vmatpush1.bf16.msra.mxu0 %v421
        %431 = vmatprep.subr.bf16.mxu0 0
        %432 = vmatpush1.bf16.msra.mxu0 %v422
        %433 = vmatprep.subr.bf16.mxu0 0
        %434 = vmatpush1.bf16.msra.mxu0 0
        %435 = vmatprep.subr.bf16.mxu0 0
        %436 = vmatpush1.bf16.msra.mxu0 0
        %437 = vmatprep.subr.bf16.mxu0 0
        %438 = vmatpush1.bf16.msra.mxu0 0
        %439 = vmatprep.subr.bf16.mxu0 0
        %440 = vmatpush1.bf16.msra.mxu0 0
        %441 = vmatprep.subr.bf16.mxu0 0
        %442 = vmatpush1.bf16.msra.mxu0 0
        %443 = vmatprep.subr.bf16.mxu0 0
        %444 = vmatpush1.bf16.msra.mxu0 0
        %445 = vmatprep.subr.bf16.mxu0 0
        %446 = vmatpush1.bf16.msra.mxu0 0
        %447 = vmatprep.subr.bf16.mxu0 0
        %448 = vmatpush1.bf16.msra.mxu0 0
        %449 = vmatprep.subr.bf16.mxu0 0
        %450 = vmatpush1.bf16.msra.mxu0 0
        %451 = vmatprep.subr.bf16.mxu0 0
        %452 = vmatpush1.bf16.msra.mxu0 0
        %453 = vmatprep.subr.bf16.mxu0 0
        %454 = vmatpush1.bf16.msra.mxu0 0
        %455 = vmatprep.subr.bf16.mxu0 0
        %456 = vmatpush1.bf16.msra.mxu0 0
        %457 = vmatprep.subr.bf16.mxu0 0
        %458 = vmatpush1.bf16.msra.mxu0 0
        %459 = vmatprep.subr.bf16.mxu0 0
        %460 = vmatpush1.bf16.msra.mxu0 0
        %461 = vmatprep.mubr.bf16.mxu0 0
        %462 = vmatmul.mubr.bf16.gmra.mrb[0].mxu0 %v427
        %v463 = vpop.f32.mrb[0].mxu0
        %v464 = vadd.f32 %v407, %v463
        %v465 = vpop.f32.mrb[0].mxu0
        %v466 = vpop.f32.mrb[0].mxu0
        %v467 = vadd.f32 %v407, %v466
        %v468 = vpop.f32.mrb[0].mxu0
        %469 = vdwg.mxu0
        %v470 = vmax.f32 %v464, 0.0
        %v471 = vmax.f32 %v467, 0.0
        %v472 = vld [vmem:[%s5] sm:$0x1]
        %473 = vmatprep.subr.mxu0 0.0
        %474 = vmatpush1.xpose.msra.mxu0 %v470
        %475 = vmatprep.subr.mxu0 0.0
        %476 = vmatpush1.xpose.msra.mxu0 %v471
        %477 = vmatprep.subr.mxu0 0.0
        %478 = vmatpush1.xpose.msra.mxu0 0.0
        %479 = vmatprep.subr.mxu0 0.0
        %480 = vmatpush1.xpose.msra.mxu0 0.0
        %481 = vmatprep.subr.mxu0 0.0
        %482 = vmatpush1.xpose.msra.mxu0 0.0
        %483 = vmatprep.subr.mxu0 0.0
        %484 = vmatpush1.xpose.msra.mxu0 0.0
        %485 = vmatprep.subr.mxu0 0.0
        %486 = vmatpush1.xpose.msra.mxu0 0.0
        %487 = vmatprep.subr.mxu0 0.0
        %488 = vmatpush1.xpose.msra.mxu0 0.0
        %489 = vmatprep.subr.mxu0 0.0
        %490 = vmatpush1.xpose.msra.mxu0 0.0
        %491 = vmatprep.subr.mxu0 0.0
        %492 = vmatpush1.xpose.msra.mxu0 0.0
        %493 = vmatprep.subr.mxu0 0.0
        %494 = vmatpush1.xpose.msra.mxu0 0.0
        %495 = vmatprep.subr.mxu0 0.0
        %496 = vmatpush1.xpose.msra.mxu0 0.0
        %497 = vmatprep.subr.mxu0 0.0
        %498 = vmatpush1.xpose.msra.mxu0 0.0
        %499 = vmatprep.subr.mxu0 0.0
        %500 = vmatpush1.xpose.msra.mxu0 0.0
        %501 = vmatprep.subr.mxu0 0.0
        %502 = vmatpush1.xpose.msra.mxu0 0.0
        %503 = vmatprep.subr.mxu0 0.0
        %504 = vmatpush1.xpose.msra.mxu0 0.0
        %505 = vmatprep.subr.mxu0 0.0
        %506 = vmatpush1.xpose.msra.mxu0 0.0
        %507 = vmatprep.subr.mxu0 0.0
        %508 = vmatpush1.xpose.msra.mxu0 0.0
        %509 = vmatprep.subr.mxu0 0.0
        %510 = vmatpush1.xpose.msra.mxu0 0.0
        %511 = vmatprep.subr.mxu0 0.0
        %512 = vmatpush1.xpose.msra.mxu0 0.0
        %513 = vmatprep.subr.mxu0 0.0
        %514 = vmatpush1.xpose.msra.mxu0 0.0
        %515 = vmatprep.subr.mxu0 0.0
        %516 = vmatpush1.xpose.msra.mxu0 0.0
        %517 = vmatprep.subr.mxu0 0.0
        %518 = vmatpush1.xpose.msra.mxu0 0.0
        %519 = vmatprep.subr.mxu0 0.0
        %520 = vmatpush1.xpose.msra.mxu0 0.0
        %521 = vmatprep.subr.mxu0 0.0
        %522 = vmatpush1.xpose.msra.mxu0 0.0
        %523 = vmatprep.subr.mxu0 0.0
        %524 = vmatpush1.xpose.msra.mxu0 0.0
        %525 = vmatprep.subr.mxu0 0.0
        %526 = vmatpush1.xpose.msra.mxu0 0.0
        %527 = vmatprep.subr.mxu0 0.0
        %528 = vmatpush1.xpose.msra.mxu0 0.0
        %529 = vmatprep.subr.mxu0 0.0
        %530 = vmatpush1.xpose.msra.mxu0 0.0
        %531 = vmatprep.subr.mxu0 0.0
        %532 = vmatpush1.xpose.msra.mxu0 0.0
        %533 = vmatprep.subr.mxu0 0.0
        %534 = vmatpush1.xpose.msra.mxu0 0.0
        %535 = vmatprep.subr.mxu0 0.0
        %536 = vmatpush1.xpose.msra.mxu0 0.0
        %537 = vmatprep.mubr.f32.mxu0 0.0
        %538 = vmatmul.mubr.f32.gmra.mrb[0].mxu0 %v472
        %v539 = vpop.f32.mrb[0].mxu0
        %v540 = vadd.f32 0.0, %v539
        %v541 = vpop.f32.mrb[0].mxu0
        %542 = vdwg.mxu0
        %vm543 = vcmask 122880
        %v544 = vsel %vm543, %v540, -inf
        %545 = vmax.xlane.f32.xlu0 %v544
        %v546 = vpop.xlane.xlu0 %545
        %v547 = vsub.f32 %v540, %v546
        %v548 = vmul.f32 %v547, 1.442695
        %v549 = vpow.pop %v548
        %v550 = vsel %vm543, %v549, 0.0
        %551 = vadd.xlane.f32.xlu0 %v550
        %v552 = vpop.xlane.xlu0 %551
        %v553 = vrcp.pop %v552
        %v554 = vmul.f32 %v552, %v553
        %v555 = vsub.f32 2.0, %v554
        %v556 = vmul.f32 %v553, %v555
        %v557 = vmul.f32 %v552, %v556
        %v558 = vsub.f32 2.0, %v557
        %v559 = vmul.f32 %v556, %v558
        %v560 = vmul.f32 %v549, %v559
        %v561 = vpack.c.bf16 %v560, %v560
        %vm563 = vcmask 130048
        %v565 = vsel %vm563, %v561, 0
        %567 = vmatprep.subr.bf16.mxu0 0
        %568 = vmatpush1.bf16.msra.mxu0 %v412
        %569 = vmatprep.subr.bf16.mxu0 0
        %570 = vmatpush1.bf16.msra.mxu0 0
        %571 = vmatprep.subr.bf16.mxu0 0
        %572 = vmatpush1.bf16.msra.mxu0 0
        %573 = vmatprep.subr.bf16.mxu0 0
        %574 = vmatpush1.bf16.msra.mxu0 0
        %575 = vmatprep.subr.bf16.mxu0 0
        %576 = vmatpush1.bf16.msra.mxu0 0
        %577 = vmatprep.subr.bf16.mxu0 0
        %578 = vmatpush1.bf16.msra.mxu0 0
        %579 = vmatprep.subr.bf16.mxu0 0
        %580 = vmatpush1.bf16.msra.mxu0 0
        %581 = vmatprep.subr.bf16.mxu0 0
        %582 = vmatpush1.bf16.msra.mxu0 0
        %583 = vmatprep.subr.bf16.mxu0 0
        %584 = vmatpush1.bf16.msra.mxu0 0
        %585 = vmatprep.subr.bf16.mxu0 0
        %586 = vmatpush1.bf16.msra.mxu0 0
        %587 = vmatprep.subr.bf16.mxu0 0
        %588 = vmatpush1.bf16.msra.mxu0 0
        %589 = vmatprep.subr.bf16.mxu0 0
        %590 = vmatpush1.bf16.msra.mxu0 0
        %591 = vmatprep.subr.bf16.mxu0 0
        %592 = vmatpush1.bf16.msra.mxu0 0
        %593 = vmatprep.subr.bf16.mxu0 0
        %594 = vmatpush1.bf16.msra.mxu0 0
        %595 = vmatprep.subr.bf16.mxu0 0
        %596 = vmatpush1.bf16.msra.mxu0 0
        %597 = vmatprep.subr.bf16.mxu0 0
        %598 = vmatpush1.bf16.msra.mxu0 0
        %599 = vmatprep.mubr.bf16.mxu0 0
        %600 = vmatmul.mubr.bf16.gmra.mrb[0].mxu0 %v565
        %v601 = vpop.f32.mrb[0].mxu0
        %v602 = vadd.f32 0.0, %v601
        %v603 = vpop.f32.mrb[0].mxu0
        %v604 = vpop.f32.mrb[0].mxu0
        %v605 = vpop.f32.mrb[0].mxu0
        %606 = vdwg.mxu0
        %vm607 = vcmask 253952
        %608 = vst.msk [vmem:[%s325] sm:$0x1] %vm607, %v602
        %609 = vst.msk [vmem:[%s331] sm:$0x1] %vm543, %v560
        %s610 = sand.u32 %s173, 1
        %s611 = scalar_lea.sflag [#allocation4], %s610
        %s612 = sand.u32 %s173, 1
        %s613 = scalar_lea.vmem [#allocation7], %s612
        %s614 = sand.u32 %s199, 1
        %s615 = scalar_lea.sflag [#allocation9], %s614
        %s616 = sand.u32 %s199, 1
        %s617 = scalar_lea.vmem [#allocation8], %s616
        // Predicated region
        $region53: #{tpu_custom_call.1} parent=43 // pred_check
          %p618 = pneg %p183
        $region54: #{tpu_custom_call.1} parent=43 // pred_check_branch
          %620 = sbr.rel (%p618) target = $region56
        $region55: #{tpu_custom_call.1} parent=43 // pred_region
          %s622 = ssub.s32 16, 16
          %623 = vsyncadd %s611, %s622
          %s624 = smul.addr %s29, 16
          %s625 = scalar_lea.hbm %s6, %s624
          %s627 = sshll.u32 %s613, 4
          %s628 = int_to_ptr.vmem [resolvable:$true] %s627
          %630 = dma.vmem_to_hbm [thread:$0]  %s628, 16, %s625, %s611
        $region56: #{tpu_custom_call.1} parent=43 // pred_fallthru
          _
        // Predicated region
        $region57: #{tpu_custom_call.1} parent=43 // pred_check
          %p631 = pneg %p209
        $region58: #{tpu_custom_call.1} parent=43 // pred_check_branch
          %633 = sbr.rel (%p631) target = $region60
        $region59: #{tpu_custom_call.1} parent=43 // pred_region
          %s635 = ssub.s32 16, 16
          %636 = vsyncadd %s615, %s635
          %s637 = smul.addr %s29, 16
          %s638 = scalar_lea.hbm %s7, %s637
          %s640 = sshll.u32 %s617, 4
          %s641 = int_to_ptr.vmem [resolvable:$true] %s640
          %643 = dma.vmem_to_hbm [thread:$0]  %s641, 16, %s638, %s615
        $region60: #{tpu_custom_call.1} parent=43 // pred_fallthru
          _
      $region44: #{tpu_custom_call.1} parent=5 // pred_fallthru
        _
      %p644 = scmp.le.s32.totalorder 2, %s24
      // Predicated region
      $region61: #{tpu_custom_call.1} parent=5 // pred_check
        %p645 = pneg %p644
      $region62: #{tpu_custom_call.1} parent=5 // pred_check_branch
        %647 = sbr.rel (%p645) target = $region64
      $region63: #{tpu_custom_call.1} parent=5 // pred_region
        %s648 = ssub.s32 %s24, 2
        // Predicated region
        $region65: #{tpu_custom_call.1} parent=63 // pred_check
          %p649 = pneg %p189
        $region66: #{tpu_custom_call.1} parent=63 // pred_check_branch
          %651 = sbr.rel (%p649) target = $region68
        $region67: #{tpu_custom_call.1} parent=63 // pred_region
          %s652 = sand.u32 %s174, 1
          %s653 = scalar_lea.sflag [#allocation4], %s652
          %s654 = sand.u32 %s174, 1
          %s655 = scalar_lea.vmem [#allocation7], %s654
          %656 = dma.done %s653, 16
        $region68: #{tpu_custom_call.1} parent=63 // pred_fallthru
          _
        // Predicated region
        $region69: #{tpu_custom_call.1} parent=63 // pred_check
          %p657 = pneg %p215
        $region70: #{tpu_custom_call.1} parent=63 // pred_check_branch
          %659 = sbr.rel (%p657) target = $region72
        $region71: #{tpu_custom_call.1} parent=63 // pred_region
          %s660 = sand.u32 %s200, 1
          %s661 = scalar_lea.sflag [#allocation9], %s660
          %s662 = sand.u32 %s200, 1
          %s663 = scalar_lea.vmem [#allocation8], %s662
          %664 = dma.done %s661, 16
        $region72: #{tpu_custom_call.1} parent=63 // pred_fallthru
          _
      $region64: #{tpu_custom_call.1} parent=5 // pred_fallthru
        _
    $region6: #{tpu_custom_call.1} parent=1 // loop_footer
      %s28 = sadd.s32 1, %s24
    $region7: #{tpu_custom_call.1} parent=1 // loop_footer_branch
      %23 = sbr.rel target = $region3
    $region8: #{tpu_custom_call.1} parent=1 // loop_exit
      _
    %665 = vsyncpa [#allocation3], 1
    %s666 = scalar_lea.sflag [#allocation3], 1
    %667 = vsyncpa %s666, 1
    %668 = vsyncpa [#allocation6], 1
    %669 = vsyncpa [#allocation4], 1
    %s670 = scalar_lea.sflag [#allocation4], 1
    %671 = vsyncpa %s670, 1
    %672 = vsyncpa [#allocation9], 1
    %s673 = scalar_lea.sflag [#allocation9], 1
    %674 = vsyncpa %s673, 1

</llo_original>
